<compile_context>
chip_gen: v7x
topology: tpu7x:2x2x1
jax: 0.10.0
libtpu: 0.0.40
codegen_flags: <defaults>
</compile_context>

<pallas_src>
import functools

import jax
import jax.numpy as jnp
from jax.experimental import pallas as pl
from jax.experimental.pallas import tpu as pltpu


# ---------------------------------------------------------------------------
# Fused Pallas kernel:
#   3x (Linear(+folded BN scale) -> shift -> ReLU) -> [APPNP + mean-pool as one
#   precomputed operator] -> fc (lane-padded)
# ---------------------------------------------------------------------------

def fused_forward_kernel(x_ref, w1_ref, b1_ref,
                         w2_ref, b2_ref,
                         w3_ref, b3_ref,
                         pm_ref, wfc_ref, bfc_ref,
                         o_ref):
    # ---- MLP stack: bf16 MXU inputs, f32 accumulation, BN folded into W ----
    h = jnp.dot(x_ref[...].astype(jnp.bfloat16), w1_ref[...],
                preferred_element_type=jnp.float32)
    h = jnp.maximum(h + b1_ref[...], 0.0)

    h = jnp.dot(h.astype(jnp.bfloat16), w2_ref[...],
                preferred_element_type=jnp.float32)
    h = jnp.maximum(h + b2_ref[...], 0.0)

    h = jnp.dot(h.astype(jnp.bfloat16), w3_ref[...],
                preferred_element_type=jnp.float32)
    h = jnp.maximum(h + b3_ref[...], 0.0)                    # [N, 128] f32

    # ---- APPNP propagation + global_mean_pool as ONE precomputed operator ----
    #   pooled = (pool @ M) @ h,  PM precomputed in the wrapper  [G_pad, N]
    pooled = jnp.dot(pm_ref[...], h.astype(jnp.bfloat16),
                     preferred_element_type=jnp.float32)      # [G_pad, 128]

    # ---- final fc (lane-padded to 128 output columns) ----
    o_ref[...] = (jnp.dot(pooled.astype(jnp.bfloat16), wfc_ref[...],
                          preferred_element_type=jnp.float32)
                  + bfc_ref[...])


# ---------------------------------------------------------------------------
# Per-call path: ONE pallas_call (+ a fused slice) under jit.
# ---------------------------------------------------------------------------

@functools.partial(jax.jit, static_argnames=("num_graphs", "n_cls"))
def appnp_graph_classifier_forward(params, x, pm_pad, num_graphs, n_cls):
    g_pad = pm_pad.shape[0]
    ncls_pad = params["wfc_pad"].shape[1]

    vmem = pl.BlockSpec(memory_space=pltpu.MemorySpace.VMEM)
    args = (x,
            params["w1s"], params["shift1"],
            params["w2s"], params["shift2"],
            params["w3s"], params["shift3"],
            pm_pad, params["wfc_pad"], params["bfc_pad"])

    out = pl.pallas_call(
        fused_forward_kernel,
        out_shape=jax.ShapeDtypeStruct((g_pad, ncls_pad), jnp.float32),
        in_specs=[vmem] * len(args),
        out_specs=vmem,
    )(*args)
    return out[:num_graphs, :n_cls]


# ---------------------------------------------------------------------------
# Topology-only precompute (run ONCE per graph structure, not per forward).
# ---------------------------------------------------------------------------

def build_normalized_adjacency(edge_index, num_nodes):
    """A_hat = D^{-1/2} (A + I) D^{-1/2}  (GCN normalization with self-loops)."""
    src = edge_index[0]
    dst = edge_index[1]
    a = jnp.zeros((num_nodes, num_nodes), jnp.float32)
    a = a.at[dst, src].add(1.0)           # message src -> dst
    a = a + jnp.eye(num_nodes, dtype=jnp.float32)
    deg = a.sum(axis=1)
    d_inv_sqrt = 1.0 / jnp.sqrt(deg)
    return d_inv_sqrt[:, None] * a * d_inv_sqrt[None, :]


def build_mean_pool_matrix(batch, num_graphs):
    onehot = (batch[None, :] == jnp.arange(num_graphs)[:, None]).astype(jnp.float32)
    counts = jnp.maximum(onehot.sum(axis=1, keepdims=True), 1.0)
    return onehot / counts


def build_propagation_pool_operator(edge_index, batch, num_nodes, num_graphs,
                                    K, alpha, g_pad):
    """PM = pool @ [ ((1-a)A_hat)^K + a * sum_{j=0}^{K-1} ((1-a)A_hat)^j ].

    Computed in f32 (exact closed form of the APPNP recurrence
    z_{k+1} = (1-a) A_hat z_k + a z_0), padded to g_pad rows, stored bf16 for a
    single-push MXU matmul inside the kernel.
    """
    a_hat = build_normalized_adjacency(edge_index, num_nodes)
    a_s = (1.0 - alpha) * a_hat

    power = jnp.eye(num_nodes, dtype=jnp.float32)          # a_s^0
    acc = jnp.zeros((num_nodes, num_nodes), jnp.float32)
    for _ in range(K):
        acc = acc + power                                  # sum a_s^0 .. a_s^{K-1}
        power = a_s @ power                                # -> a_s^{k+1}
    m = power + alpha * acc                                # a_s^K + a * sum

    pool = build_mean_pool_matrix(batch, num_graphs)       # [G, N]
    pm = pool @ m                                          # [G, N]

    pm_pad = jnp.zeros((g_pad, num_nodes), jnp.float32).at[:num_graphs].set(pm)
    return pm_pad.astype(jnp.bfloat16)


# ---------------------------------------------------------------------------
# Parameter construction (deterministic, synthetic)
# ---------------------------------------------------------------------------

def init_linear(key, fin, fout):
    k_w, k_b = jax.random.split(key)
    bound = 1.0 / jnp.sqrt(fin)
    w = jax.random.uniform(k_w, (fout, fin), jnp.float32, -bound, bound)
    b = jax.random.uniform(k_b, (fout,), jnp.float32, -bound, bound)
    return w, b


def init_bn(key, f):
    k1, k2 = jax.random.split(key)
    gamma = jnp.ones((f,), jnp.float32)
    beta = jnp.zeros((f,), jnp.float32)
    running_mean = 0.05 * jax.random.normal(k1, (f,), jnp.float32)
    running_var = 1.0 + 0.1 * jax.random.uniform(k2, (f,), jnp.float32)
    return gamma, beta, running_mean, running_var


def fold_linear_bn_into_weight(w, b, gamma, beta, rm, rv, eps=1e-5):
    """Fold eval-mode BatchNorm1d into the preceding Linear.

    y = BN(x W^T + b) = x (W^T * s) + ((b - rm) * s + beta),  s = gamma/sqrt(rv+eps)
    Returns (w_t_scaled [fin,fout] bf16, shift [1,fout] f32).
    """
    s = gamma / jnp.sqrt(rv + eps)
    w_t_scaled = (w.T * s[None, :]).astype(jnp.bfloat16)
    shift = ((b - rm) * s + beta)[None, :].astype(jnp.float32)
    return w_t_scaled, shift


# ---------------------------------------------------------------------------
# Main
# ---------------------------------------------------------------------------

if __name__ == "__main__":
    key = jax.random.PRNGKey(0)
    keys = jax.random.split(key, 16)

    # Shapes: 16 nodes, 512-dim input features, 2 graphs of 8 nodes each.
    N, F_IN = 16, 512
    NUM_GRAPHS, N_CLS = 2, 2
    K, ALPHA = 10, 0.1
    G_PAD, NCLS_PAD = 8, 128          # sublane / lane padding for the output

    # Parameters (deterministic synthetic init, matching module shapes)
    w1, b1 = init_linear(keys[0], 512, 256)
    g1, be1, rm1, rv1 = init_bn(keys[1], 256)
    w2, b2 = init_linear(keys[2], 256, 256)
    g2, be2, rm2, rv2 = init_bn(keys[3], 256)
    w3, b3 = init_linear(keys[4], 256, 128)
    g3, be3, rm3, rv3 = init_bn(keys[5], 128)
    wfc, bfc = init_linear(keys[6], 128, N_CLS)

    w1s, shift1 = fold_linear_bn_into_weight(w1, b1, g1, be1, rm1, rv1)
    w2s, shift2 = fold_linear_bn_into_weight(w2, b2, g2, be2, rm2, rv2)
    w3s, shift3 = fold_linear_bn_into_weight(w3, b3, g3, be3, rm3, rv3)

    # fc padded to 128 output lanes (zero columns), bias padded likewise.
    wfc_pad = jnp.zeros((128, NCLS_PAD), jnp.float32).at[:, :N_CLS].set(wfc.T)
    bfc_pad = jnp.zeros((1, NCLS_PAD), jnp.float32).at[0, :N_CLS].set(bfc)

    params = {
        "w1s": w1s, "shift1": shift1,
        "w2s": w2s, "shift2": shift2,
        "w3s": w3s, "shift3": shift3,
        "wfc_pad": wfc_pad.astype(jnp.bfloat16),
        "bfc_pad": bfc_pad,
    }

    # Inputs
    x = jax.random.normal(keys[7], (N, F_IN), jnp.float32)

    # Two 8-node bidirectional chains (graph 0: nodes 0-7, graph 1: nodes 8-15)
    src_list, dst_list = [], []
    for base in (0, 8):
        for i in range(7):
            src_list += [base + i, base + i + 1]
            dst_list += [base + i + 1, base + i]
    edge_index = jnp.array([src_list, dst_list], dtype=jnp.int32)  # [2, 28]
    batch = jnp.array([0] * 8 + [1] * 8, dtype=jnp.int32)          # [16]

    # Topology-only precompute, done ONCE per graph structure (not per call).
    pm_pad = build_propagation_pool_operator(edge_index, batch, N, NUM_GRAPHS,
                                             K, ALPHA, G_PAD)
    pm_pad = jax.block_until_ready(pm_pad)

    out = appnp_graph_classifier_forward(params, x, pm_pad, NUM_GRAPHS, N_CLS)
    out = jax.block_until_ready(out)

    assert out.shape == (NUM_GRAPHS, N_CLS) and out.dtype == jnp.float32
    assert bool(jnp.all(jnp.isfinite(out)))
    print("KERNEL_OK")
</pallas_src>

<mosaic_0001>
module attributes {stable_mosaic.version = 11 : i64} {
  func.func @fused_forward_kernel(%arg0: memref<16x512xf32, #tpu.memory_space<vmem>>, %arg1: memref<512x256xbf16, #tpu.memory_space<vmem>>, %arg2: memref<1x256xf32, #tpu.memory_space<vmem>>, %arg3: memref<256x256xbf16, #tpu.memory_space<vmem>>, %arg4: memref<1x256xf32, #tpu.memory_space<vmem>>, %arg5: memref<256x128xbf16, #tpu.memory_space<vmem>>, %arg6: memref<1x128xf32, #tpu.memory_space<vmem>>, %arg7: memref<8x16xbf16, #tpu.memory_space<vmem>>, %arg8: memref<128x128xbf16, #tpu.memory_space<vmem>>, %arg9: memref<1x128xf32, #tpu.memory_space<vmem>>, %arg10: memref<8x128xf32, #tpu.memory_space<vmem>>) attributes {dimension_semantics = [], scalar_prefetch = 0 : i64, scratch_operands = 0 : i64, tpu.core_type = #tpu.core_type<tc>} {
    %c0 = arith.constant 0 : index
    %c0_0 = arith.constant 0 : index
    %0 = vector.load %arg0[%c0, %c0_0] : memref<16x512xf32, #tpu.memory_space<vmem>>, vector<16x512xf32>
    %1 = arith.truncf %0 : vector<16x512xf32> to vector<16x512xbf16>
    %c0_1 = arith.constant 0 : index
    %c0_2 = arith.constant 0 : index
    %2 = vector.load %arg1[%c0_1, %c0_2] : memref<512x256xbf16, #tpu.memory_space<vmem>>, vector<512x256xbf16>
    %cst = arith.constant dense<0.000000e+00> : vector<16x256xf32>
    %3 = tpu.matmul %1, %2, %cst {dimension_numbers = #tpu.dot_dimension_numbers<[1], [0], [0], [1], [0, 0, 1, 1], [], []>} : vector<16x512xbf16>, vector<512x256xbf16>, vector<16x256xf32> -> vector<16x256xf32>
    %c0_3 = arith.constant 0 : index
    %c0_4 = arith.constant 0 : index
    %4 = vector.load %arg2[%c0_3, %c0_4] : memref<1x256xf32, #tpu.memory_space<vmem>>, vector<1x256xf32>
    %5 = vector.broadcast %4 : vector<1x256xf32> to vector<16x256xf32>
    %6 = arith.addf %3, %5 : vector<16x256xf32>
    %cst_5 = arith.constant 0.000000e+00 : f32
    %7 = vector.broadcast %cst_5 : f32 to vector<16x256xf32>
    %8 = arith.maximumf %6, %7 : vector<16x256xf32>
    %9 = arith.truncf %8 : vector<16x256xf32> to vector<16x256xbf16>
    %c0_6 = arith.constant 0 : index
    %c0_7 = arith.constant 0 : index
    %10 = vector.load %arg3[%c0_6, %c0_7] : memref<256x256xbf16, #tpu.memory_space<vmem>>, vector<256x256xbf16>
    %cst_8 = arith.constant dense<0.000000e+00> : vector<16x256xf32>
    %11 = tpu.matmul %9, %10, %cst_8 {dimension_numbers = #tpu.dot_dimension_numbers<[1], [0], [0], [1], [0, 0, 1, 1], [], []>} : vector<16x256xbf16>, vector<256x256xbf16>, vector<16x256xf32> -> vector<16x256xf32>
    %c0_9 = arith.constant 0 : index
    %c0_10 = arith.constant 0 : index
    %12 = vector.load %arg4[%c0_9, %c0_10] : memref<1x256xf32, #tpu.memory_space<vmem>>, vector<1x256xf32>
    %13 = vector.broadcast %12 : vector<1x256xf32> to vector<16x256xf32>
    %14 = arith.addf %11, %13 : vector<16x256xf32>
    %cst_11 = arith.constant 0.000000e+00 : f32
    %15 = vector.broadcast %cst_11 : f32 to vector<16x256xf32>
    %16 = arith.maximumf %14, %15 : vector<16x256xf32>
    %17 = arith.truncf %16 : vector<16x256xf32> to vector<16x256xbf16>
    %c0_12 = arith.constant 0 : index
    %c0_13 = arith.constant 0 : index
    %18 = vector.load %arg5[%c0_12, %c0_13] : memref<256x128xbf16, #tpu.memory_space<vmem>>, vector<256x128xbf16>
    %cst_14 = arith.constant dense<0.000000e+00> : vector<16x128xf32>
    %19 = tpu.matmul %17, %18, %cst_14 {dimension_numbers = #tpu.dot_dimension_numbers<[1], [0], [0], [1], [0, 0, 1, 1], [], []>} : vector<16x256xbf16>, vector<256x128xbf16>, vector<16x128xf32> -> vector<16x128xf32>
    %c0_15 = arith.constant 0 : index
    %c0_16 = arith.constant 0 : index
    %20 = vector.load %arg6[%c0_15, %c0_16] : memref<1x128xf32, #tpu.memory_space<vmem>>, vector<1x128xf32>
    %21 = vector.broadcast %20 : vector<1x128xf32> to vector<16x128xf32>
    %22 = arith.addf %19, %21 : vector<16x128xf32>
    %cst_17 = arith.constant 0.000000e+00 : f32
    %23 = vector.broadcast %cst_17 : f32 to vector<16x128xf32>
    %24 = arith.maximumf %22, %23 : vector<16x128xf32>
    %c0_18 = arith.constant 0 : index
    %c0_19 = arith.constant 0 : index
    %25 = vector.load %arg7[%c0_18, %c0_19] : memref<8x16xbf16, #tpu.memory_space<vmem>>, vector<8x16xbf16>
    %26 = arith.truncf %24 : vector<16x128xf32> to vector<16x128xbf16>
    %cst_20 = arith.constant dense<0.000000e+00> : vector<8x128xf32>
    %27 = tpu.matmul %25, %26, %cst_20 {dimension_numbers = #tpu.dot_dimension_numbers<[1], [0], [0], [1], [0, 0, 1, 1], [], []>} : vector<8x16xbf16>, vector<16x128xbf16>, vector<8x128xf32> -> vector<8x128xf32>
    %28 = arith.truncf %27 : vector<8x128xf32> to vector<8x128xbf16>
    %c0_21 = arith.constant 0 : index
    %c0_22 = arith.constant 0 : index
    %29 = vector.load %arg8[%c0_21, %c0_22] : memref<128x128xbf16, #tpu.memory_space<vmem>>, vector<128x128xbf16>
    %cst_23 = arith.constant dense<0.000000e+00> : vector<8x128xf32>
    %30 = tpu.matmul %28, %29, %cst_23 {dimension_numbers = #tpu.dot_dimension_numbers<[1], [0], [0], [1], [0, 0, 1, 1], [], []>} : vector<8x128xbf16>, vector<128x128xbf16>, vector<8x128xf32> -> vector<8x128xf32>
    %c0_24 = arith.constant 0 : index
    %c0_25 = arith.constant 0 : index
    %31 = vector.load %arg9[%c0_24, %c0_25] : memref<1x128xf32, #tpu.memory_space<vmem>>, vector<1x128xf32>
    %32 = vector.broadcast %31 : vector<1x128xf32> to vector<8x128xf32>
    %33 = arith.addf %30, %32 : vector<8x128xf32>
    %c0_26 = arith.constant 0 : index
    %c0_27 = arith.constant 0 : index
    %34 = vector.load %arg10[%c0_26, %c0_27] : memref<8x128xf32, #tpu.memory_space<vmem>>, vector<8x128xf32>
    tpu.vector_store %arg10[%c0_26, %c0_27], %33 {strides = array<i32>} : memref<8x128xf32, #tpu.memory_space<vmem>>, vector<8x128xf32>,
    return
  }
}

</mosaic_0001>

<llo_original>
// kernel: appnp_graph_classifier_forward.1
$region0: #{appnp_graph_classifier_forward.1}
  #allocation0 [shape = 'u32[]', space=smem, size = 0x4, offset = 0x4, fixed_abs, tag = 'smem constant byte address 0x4 - core index']
  #allocation1 [shape = 'u32[144,128]{1,0:T(1,128)}', space=vmem, size = 0x12000, scoped, tag = 'internal scratch']
  %s0 = inlined_call_operand.hbm [shape: f32[16,512], index: 0, kind: input, shape index: {}]
  %s1 = inlined_call_operand.hbm [shape: bf16[512,256], index: 1, kind: input, shape index: {}]
  %s2 = inlined_call_operand.vmem [shape: f32[1,256], index: 2, kind: input, shape index: {}]
  %s3 = inlined_call_operand.hbm [shape: bf16[256,256], index: 3, kind: input, shape index: {}]
  %s4 = inlined_call_operand.hbm [shape: f32[1,256], index: 4, kind: input, shape index: {}]
  %s5 = inlined_call_operand.hbm [shape: bf16[256,128], index: 5, kind: input, shape index: {}]
  %s6 = inlined_call_operand.vmem [shape: f32[1,128], index: 6, kind: input, shape index: {}]
  %s7 = inlined_call_operand.vmem [shape: bf16[8,16], index: 7, kind: input, shape index: {}]
  %s8 = inlined_call_operand.hbm [shape: bf16[128,128], index: 8, kind: input, shape index: {}]
  %s9 = inlined_call_operand.hbm [shape: f32[1,128], index: 9, kind: input, shape index: {}]
  %s10 = inlined_call_operand.vmem [shape: f32[8,128], index: 10, kind: output, shape index: {}]
  %s11 = sld [smem:[#allocation0]]
  $region78: #{appnp_graph_classifier_forward.1} parent=0
    _
  %s13 = ssub.s32 1, %s11
  %s14 = scalar_select 0, %s13, %s11
  $region1: #{appnp_graph_classifier_forward.1} parent=0
    #allocation2 [shape = 'u8[32768]{0}', space=vmem, size = 0x8000, scoped, tag = 'input window, operand 0, single buffered']
    #allocation3 [shape = 's32[1]{0}', space=sflag, size = 0x4, scoped, tag = 'scoped memory for appnp_graph_classifier_forward.1']
    #allocation4 [shape = 'u8[262144]{0}', space=vmem, size = 0x40000, scoped, tag = 'input window, operand 1, single buffered']
    #allocation5 [shape = 's32[1]{0}', space=sflag, size = 0x4, scoped, tag = 'scoped memory for appnp_graph_classifier_forward.1']
    #allocation6 [shape = 'u8[131072]{0}', space=vmem, size = 0x20000, scoped, tag = 'input window, operand 3, single buffered']
    #allocation7 [shape = 'u8[1024]{0}', space=vmem, size = 0x400, scoped, tag = 'input window, operand 4, single buffered']
    #allocation8 [shape = 's32[1]{0}', space=sflag, size = 0x4, scoped, tag = 'scoped memory for appnp_graph_classifier_forward.1']
    #allocation9 [shape = 'u8[65536]{0}', space=vmem, size = 0x10000, scoped, tag = 'input window, operand 5, single buffered']
    #allocation10 [shape = 'u8[32768]{0}', space=vmem, size = 0x8000, scoped, tag = 'input window, operand 8, single buffered']
    #allocation11 [shape = 's32[1]{0}', space=sflag, size = 0x4, scoped, tag = 'scoped memory for appnp_graph_classifier_forward.1']
    #allocation12 [shape = 'u8[512]{0}', space=vmem, size = 0x400, scoped, tag = 'input window, operand 9, single buffered']
    %15 = vsyncpa [#allocation3], 0
    %16 = vsyncpa [#allocation5], 0
    %17 = vsyncpa [#allocation8], 0
    %18 = vsyncpa [#allocation11], 0
    // Predicated region
    $region2: #{appnp_graph_classifier_forward.1} parent=1 // pred_check
      _
    $region3: #{appnp_graph_classifier_forward.1} parent=1 // pred_check_branch
      %20 = sbr.rel (0) target = $region5
    $region4: #{appnp_graph_classifier_forward.1} parent=1 // pred_region
      %s22 = ssub.s32 1024, 1024
      %23 = vsyncadd [#allocation3], %s22
      %s24 = sshll.u32 [#allocation2], 4
      %s25 = int_to_ptr.vmem [resolvable:$true] %s24
      %30 = dma.hbm_to_vmem [thread:$0]  %s0, 1024, %s25, [#allocation3], 512, 512, 32
    $region5: #{appnp_graph_classifier_forward.1} parent=1 // pred_fallthru
      _
    // Predicated region
    $region6: #{appnp_graph_classifier_forward.1} parent=1 // pred_check
      _
    $region7: #{appnp_graph_classifier_forward.1} parent=1 // pred_check_branch
      %32 = sbr.rel (0) target = $region9
    $region8: #{appnp_graph_classifier_forward.1} parent=1 // pred_region
      %s34 = ssub.s32 8192, 8192
      %35 = vsyncadd [#allocation5], %s34
      %s36 = sshll.u32 [#allocation4], 4
      %s37 = int_to_ptr.vmem [resolvable:$true] %s36
      %42 = dma.hbm_to_vmem [thread:$0]  %s1, 8192, %s37, [#allocation5], 128, 128, 8
    $region9: #{appnp_graph_classifier_forward.1} parent=1 // pred_fallthru
      _
    // Predicated region
    $region10: #{appnp_graph_classifier_forward.1} parent=1 // pred_check
      _
    $region11: #{appnp_graph_classifier_forward.1} parent=1 // pred_check_branch
      %44 = sbr.rel (0) target = $region13
    $region12: #{appnp_graph_classifier_forward.1} parent=1 // pred_region
      _
    $region13: #{appnp_graph_classifier_forward.1} parent=1 // pred_fallthru
      _
    // Predicated region
    $region14: #{appnp_graph_classifier_forward.1} parent=1 // pred_check
      _
    $region15: #{appnp_graph_classifier_forward.1} parent=1 // pred_check_branch
      %46 = sbr.rel (0) target = $region17
    $region16: #{appnp_graph_classifier_forward.1} parent=1 // pred_region
      %s48 = ssub.s32 4096, 4096
      %49 = vsyncadd [#allocation5], %s48
      %s50 = sshll.u32 [#allocation6], 4
      %s51 = int_to_ptr.vmem [resolvable:$true] %s50
      %56 = dma.hbm_to_vmem [thread:$0]  %s3, 4096, %s51, [#allocation5], 128, 128, 8
    $region17: #{appnp_graph_classifier_forward.1} parent=1 // pred_fallthru
      _
    // Predicated region
    $region18: #{appnp_graph_classifier_forward.1} parent=1 // pred_check
      _
    $region19: #{appnp_graph_classifier_forward.1} parent=1 // pred_check_branch
      %58 = sbr.rel (0) target = $region21
    $region20: #{appnp_graph_classifier_forward.1} parent=1 // pred_region
      %s60 = ssub.s32 32, 32
      %61 = vsyncadd [#allocation8], %s60
      %s63 = sshll.u32 [#allocation7], 4
      %s64 = int_to_ptr.vmem [resolvable:$true] %s63
      %66 = dma.hbm_to_vmem [thread:$0]  %s4, 32, %s64, [#allocation8]
    $region21: #{appnp_graph_classifier_forward.1} parent=1 // pred_fallthru
      _
    // Predicated region
    $region22: #{appnp_graph_classifier_forward.1} parent=1 // pred_check
      _
    $region23: #{appnp_graph_classifier_forward.1} parent=1 // pred_check_branch
      %68 = sbr.rel (0) target = $region25
    $region24: #{appnp_graph_classifier_forward.1} parent=1 // pred_region
      %s70 = ssub.s32 2048, 2048
      %71 = vsyncadd [#allocation8], %s70
      %s72 = sshll.u32 [#allocation9], 4
      %s73 = int_to_ptr.vmem [resolvable:$true] %s72
      %78 = dma.hbm_to_vmem [thread:$0]  %s5, 2048, %s73, [#allocation8], 64, 64, 4
    $region25: #{appnp_graph_classifier_forward.1} parent=1 // pred_fallthru
      _
    // Predicated region
    $region26: #{appnp_graph_classifier_forward.1} parent=1 // pred_check
      _
    $region27: #{appnp_graph_classifier_forward.1} parent=1 // pred_check_branch
      %80 = sbr.rel (0) target = $region29
    $region28: #{appnp_graph_classifier_forward.1} parent=1 // pred_region
      _
    $region29: #{appnp_graph_classifier_forward.1} parent=1 // pred_fallthru
      _
    // Predicated region
    $region30: #{appnp_graph_classifier_forward.1} parent=1 // pred_check
      _
    $region31: #{appnp_graph_classifier_forward.1} parent=1 // pred_check_branch
      %82 = sbr.rel (0) target = $region33
    $region32: #{appnp_graph_classifier_forward.1} parent=1 // pred_region
      _
    $region33: #{appnp_graph_classifier_forward.1} parent=1 // pred_fallthru
      _
    // Predicated region
    $region34: #{appnp_graph_classifier_forward.1} parent=1 // pred_check
      _
    $region35: #{appnp_graph_classifier_forward.1} parent=1 // pred_check_branch
      %84 = sbr.rel (0) target = $region37
    $region36: #{appnp_graph_classifier_forward.1} parent=1 // pred_region
      %s86 = ssub.s32 1024, 1024
      %87 = vsyncadd [#allocation11], %s86
      %s88 = sshll.u32 [#allocation10], 4
      %s89 = int_to_ptr.vmem [resolvable:$true] %s88
      %94 = dma.hbm_to_vmem [thread:$0]  %s8, 1024, %s89, [#allocation11], 64, 64, 4
    $region37: #{appnp_graph_classifier_forward.1} parent=1 // pred_fallthru
      _
    // Predicated region
    $region38: #{appnp_graph_classifier_forward.1} parent=1 // pred_check
      _
    $region39: #{appnp_graph_classifier_forward.1} parent=1 // pred_check_branch
      %96 = sbr.rel (0) target = $region41
    $region40: #{appnp_graph_classifier_forward.1} parent=1 // pred_region
      %s98 = ssub.s32 16, 16
      %99 = vsyncadd [#allocation11], %s98
      %s101 = sshll.u32 [#allocation12], 4
      %s102 = int_to_ptr.vmem [resolvable:$true] %s101
      %104 = dma.hbm_to_vmem [thread:$0]  %s9, 16, %s102, [#allocation11]
    $region41: #{appnp_graph_classifier_forward.1} parent=1 // pred_fallthru
      _
    // Predicated region
    $region42: #{appnp_graph_classifier_forward.1} parent=1 // pred_check
      _
    $region43: #{appnp_graph_classifier_forward.1} parent=1 // pred_check_branch
      %106 = sbr.rel (0) target = $region45
    $region44: #{appnp_graph_classifier_forward.1} parent=1 // pred_region
      %107 = dma.done [#allocation3], 1024
    $region45: #{appnp_graph_classifier_forward.1} parent=1 // pred_fallthru
      _
    // Predicated region
    $region46: #{appnp_graph_classifier_forward.1} parent=1 // pred_check
      _
    $region47: #{appnp_graph_classifier_forward.1} parent=1 // pred_check_branch
      %109 = sbr.rel (0) target = $region49
    $region48: #{appnp_graph_classifier_forward.1} parent=1 // pred_region
      %110 = dma.done [#allocation5], 8192
    $region49: #{appnp_graph_classifier_forward.1} parent=1 // pred_fallthru
      _
    // Predicated region
    $region50: #{appnp_graph_classifier_forward.1} parent=1 // pred_check
      _
    $region51: #{appnp_graph_classifier_forward.1} parent=1 // pred_check_branch
      %112 = sbr.rel (0) target = $region53
    $region52: #{appnp_graph_classifier_forward.1} parent=1 // pred_region
      %113 = dma.done [#allocation5], 4096
    $region53: #{appnp_graph_classifier_forward.1} parent=1 // pred_fallthru
      _
    // Predicated region
    $region54: #{appnp_graph_classifier_forward.1} parent=1 // pred_check
      _
    $region55: #{appnp_graph_classifier_forward.1} parent=1 // pred_check_branch
      %115 = sbr.rel (0) target = $region57
    $region56: #{appnp_graph_classifier_forward.1} parent=1 // pred_region
      %116 = dma.done [#allocation8], 32
    $region57: #{appnp_graph_classifier_forward.1} parent=1 // pred_fallthru
      _
    // Predicated region
    $region58: #{appnp_graph_classifier_forward.1} parent=1 // pred_check
      _
    $region59: #{appnp_graph_classifier_forward.1} parent=1 // pred_check_branch
      %118 = sbr.rel (0) target = $region61
    $region60: #{appnp_graph_classifier_forward.1} parent=1 // pred_region
      %119 = dma.done [#allocation8], 2048
    $region61: #{appnp_graph_classifier_forward.1} parent=1 // pred_fallthru
      _
    // Predicated region
    $region62: #{appnp_graph_classifier_forward.1} parent=1 // pred_check
      _
    $region63: #{appnp_graph_classifier_forward.1} parent=1 // pred_check_branch
      %121 = sbr.rel (0) target = $region65
    $region64: #{appnp_graph_classifier_forward.1} parent=1 // pred_region
      %122 = dma.done [#allocation11], 1024
    $region65: #{appnp_graph_classifier_forward.1} parent=1 // pred_fallthru
      _
    // Predicated region
    $region66: #{appnp_graph_classifier_forward.1} parent=1 // pred_check
      _
    $region67: #{appnp_graph_classifier_forward.1} parent=1 // pred_check_branch
      %124 = sbr.rel (0) target = $region69
    $region68: #{appnp_graph_classifier_forward.1} parent=1 // pred_region
      %125 = dma.done [#allocation11], 16
    $region69: #{appnp_graph_classifier_forward.1} parent=1 // pred_fallthru
      _
    %v127 = vld [vmem:[#allocation2] sm:$0xff]
    %v128 = vld [vmem:[#allocation2 + $0x8] sm:$0xff]
    %v129 = vld [vmem:[#allocation2 + $0x10] sm:$0xff]
    %v130 = vld [vmem:[#allocation2 + $0x18] sm:$0xff]
    %v131 = vld [vmem:[#allocation2 + $0x20] sm:$0xff]
    %v132 = vld [vmem:[#allocation2 + $0x28] sm:$0xff]
    %v133 = vld [vmem:[#allocation2 + $0x30] sm:$0xff]
    %v134 = vld [vmem:[#allocation2 + $0x38] sm:$0xff]
    %v135 = vpack.c.bf16 %v131, %v127
    %v136 = vpack.c.bf16 %v132, %v128
    %v137 = vpack.c.bf16 %v133, %v129
    %v138 = vpack.c.bf16 %v134, %v130
    %v139 = vld [vmem:[#allocation4] sm:$0xff]
    %v140 = vld [vmem:[#allocation4 + $0x8] sm:$0xff]
    %v141 = vld [vmem:[#allocation4 + $0x10] sm:$0xff]
    %v142 = vld [vmem:[#allocation4 + $0x18] sm:$0xff]
    %v143 = vld [vmem:[#allocation4 + $0x20] sm:$0xff]
    %v144 = vld [vmem:[#allocation4 + $0x28] sm:$0xff]
    %v145 = vld [vmem:[#allocation4 + $0x30] sm:$0xff]
    %v146 = vld [vmem:[#allocation4 + $0x38] sm:$0xff]
    %v147 = vld [vmem:[#allocation4 + $0x40] sm:$0xff]
    %v148 = vld [vmem:[#allocation4 + $0x48] sm:$0xff]
    %v149 = vld [vmem:[#allocation4 + $0x50] sm:$0xff]
    %v150 = vld [vmem:[#allocation4 + $0x58] sm:$0xff]
    %v151 = vld [vmem:[#allocation4 + $0x60] sm:$0xff]
    %v152 = vld [vmem:[#allocation4 + $0x68] sm:$0xff]
    %v153 = vld [vmem:[#allocation4 + $0x70] sm:$0xff]
    %v154 = vld [vmem:[#allocation4 + $0x78] sm:$0xff]
    %v155 = vld [vmem:[#allocation4 + $0x80] sm:$0xff]
    %v156 = vld [vmem:[#allocation4 + $0x88] sm:$0xff]
    %v157 = vld [vmem:[#allocation4 + $0x90] sm:$0xff]
    %v158 = vld [vmem:[#allocation4 + $0x98] sm:$0xff]
    %v159 = vld [vmem:[#allocation4 + $0xa0] sm:$0xff]
    %v160 = vld [vmem:[#allocation4 + $0xa8] sm:$0xff]
    %v161 = vld [vmem:[#allocation4 + $0xb0] sm:$0xff]
    %v162 = vld [vmem:[#allocation4 + $0xb8] sm:$0xff]
    %v163 = vld [vmem:[#allocation4 + $0xc0] sm:$0xff]
    %v164 = vld [vmem:[#allocation4 + $0xc8] sm:$0xff]
    %v165 = vld [vmem:[#allocation4 + $0xd0] sm:$0xff]
    %v166 = vld [vmem:[#allocation4 + $0xd8] sm:$0xff]
    %v167 = vld [vmem:[#allocation4 + $0xe0] sm:$0xff]
    %v168 = vld [vmem:[#allocation4 + $0xe8] sm:$0xff]
    %v169 = vld [vmem:[#allocation4 + $0xf0] sm:$0xff]
    %v170 = vld [vmem:[#allocation4 + $0xf8] sm:$0xff]
    %v171 = vld [vmem:[#allocation4 + $0x100] sm:$0xff]
    %v172 = vld [vmem:[#allocation4 + $0x108] sm:$0xff]
    %v173 = vld [vmem:[#allocation4 + $0x110] sm:$0xff]
    %v174 = vld [vmem:[#allocation4 + $0x118] sm:$0xff]
    %v175 = vld [vmem:[#allocation4 + $0x120] sm:$0xff]
    %v176 = vld [vmem:[#allocation4 + $0x128] sm:$0xff]
    %v177 = vld [vmem:[#allocation4 + $0x130] sm:$0xff]
    %v178 = vld [vmem:[#allocation4 + $0x138] sm:$0xff]
    %v179 = vld [vmem:[#allocation4 + $0x140] sm:$0xff]
    %v180 = vld [vmem:[#allocation4 + $0x148] sm:$0xff]
    %v181 = vld [vmem:[#allocation4 + $0x150] sm:$0xff]
    %v182 = vld [vmem:[#allocation4 + $0x158] sm:$0xff]
    %v183 = vld [vmem:[#allocation4 + $0x160] sm:$0xff]
    %v184 = vld [vmem:[#allocation4 + $0x168] sm:$0xff]
    %v185 = vld [vmem:[#allocation4 + $0x170] sm:$0xff]
    %v186 = vld [vmem:[#allocation4 + $0x178] sm:$0xff]
    %v187 = vld [vmem:[#allocation4 + $0x180] sm:$0xff]
    %v188 = vld [vmem:[#allocation4 + $0x188] sm:$0xff]
    %v189 = vld [vmem:[#allocation4 + $0x190] sm:$0xff]
    %v190 = vld [vmem:[#allocation4 + $0x198] sm:$0xff]
    %v191 = vld [vmem:[#allocation4 + $0x1a0] sm:$0xff]
    %v192 = vld [vmem:[#allocation4 + $0x1a8] sm:$0xff]
    %v193 = vld [vmem:[#allocation4 + $0x1b0] sm:$0xff]
    %v194 = vld [vmem:[#allocation4 + $0x1b8] sm:$0xff]
    %v195 = vld [vmem:[#allocation4 + $0x1c0] sm:$0xff]
    %v196 = vld [vmem:[#allocation4 + $0x1c8] sm:$0xff]
    %v197 = vld [vmem:[#allocation4 + $0x1d0] sm:$0xff]
    %v198 = vld [vmem:[#allocation4 + $0x1d8] sm:$0xff]
    %v199 = vld [vmem:[#allocation4 + $0x1e0] sm:$0xff]
    %v200 = vld [vmem:[#allocation4 + $0x1e8] sm:$0xff]
    %v201 = vld [vmem:[#allocation4 + $0x1f0] sm:$0xff]
    %v202 = vld [vmem:[#allocation4 + $0x1f8] sm:$0xff]
    %v203 = vld [vmem:[%s2] sm:$0x3]
    %v205 = vlaneseq
    %v206 = vshrl.u32 %v205, 7
    %v207 = vsub.s32 0, %v206
    %v208 = vrot.slane %v203, %v207
    %v209 = vlaneseq
    %v210 = vshrl.u32 %v209, 7
    %v211 = vsub.s32 1, %v210
    %v212 = vrot.slane %v203, %v211
    %v279 = vunpack.c.l.b16 %v139
    %v280 = vunpack.c.h.b16 %v139
    %v281 = vunpack.c.l.b16 %v140
    %v282 = vunpack.c.h.b16 %v140
    %v283 = vunpack.c.l.b16 %v141
    %v284 = vunpack.c.h.b16 %v141
    %v285 = vunpack.c.l.b16 %v142
    %v286 = vunpack.c.h.b16 %v142
    %v287 = vunpack.c.l.b16 %v143
    %v288 = vunpack.c.h.b16 %v143
    %v289 = vunpack.c.l.b16 %v144
    %v290 = vunpack.c.h.b16 %v144
    %v291 = vunpack.c.l.b16 %v145
    %v292 = vunpack.c.h.b16 %v145
    %v293 = vunpack.c.l.b16 %v146
    %v294 = vunpack.c.h.b16 %v146
    %v295 = vunpack.c.l.b16 %v147
    %v296 = vunpack.c.h.b16 %v147
    %v297 = vunpack.c.l.b16 %v148
    %v298 = vunpack.c.h.b16 %v148
    %v299 = vunpack.c.l.b16 %v149
    %v300 = vunpack.c.h.b16 %v149
    %v301 = vunpack.c.l.b16 %v150
    %v302 = vunpack.c.h.b16 %v150
    %v303 = vunpack.c.l.b16 %v151
    %v304 = vunpack.c.h.b16 %v151
    %v305 = vunpack.c.l.b16 %v152
    %v306 = vunpack.c.h.b16 %v152
    %v307 = vunpack.c.l.b16 %v153
    %v308 = vunpack.c.h.b16 %v153
    %v309 = vunpack.c.l.b16 %v154
    %v310 = vunpack.c.h.b16 %v154
    %v311 = vunpack.c.l.b16 %v155
    %v312 = vunpack.c.h.b16 %v155
    %v313 = vunpack.c.l.b16 %v156
    %v314 = vunpack.c.h.b16 %v156
    %v315 = vunpack.c.l.b16 %v157
    %v316 = vunpack.c.h.b16 %v157
    %v317 = vunpack.c.l.b16 %v158
    %v318 = vunpack.c.h.b16 %v158
    %v319 = vunpack.c.l.b16 %v159
    %v320 = vunpack.c.h.b16 %v159
    %v321 = vunpack.c.l.b16 %v160
    %v322 = vunpack.c.h.b16 %v160
    %v323 = vunpack.c.l.b16 %v161
    %v324 = vunpack.c.h.b16 %v161
    %v325 = vunpack.c.l.b16 %v162
    %v326 = vunpack.c.h.b16 %v162
    %v327 = vunpack.c.l.b16 %v163
    %v328 = vunpack.c.h.b16 %v163
    %v329 = vunpack.c.l.b16 %v164
    %v330 = vunpack.c.h.b16 %v164
    %v331 = vunpack.c.l.b16 %v165
    %v332 = vunpack.c.h.b16 %v165
    %v333 = vunpack.c.l.b16 %v166
    %v334 = vunpack.c.h.b16 %v166
    %v335 = vunpack.c.l.b16 %v167
    %v336 = vunpack.c.h.b16 %v167
    %v337 = vunpack.c.l.b16 %v168
    %v338 = vunpack.c.h.b16 %v168
    %v339 = vunpack.c.l.b16 %v169
    %v340 = vunpack.c.h.b16 %v169
    %v341 = vunpack.c.l.b16 %v170
    %v342 = vunpack.c.h.b16 %v170
    %v343 = vunpack.c.l.b16 %v171
    %v344 = vunpack.c.h.b16 %v171
    %v345 = vunpack.c.l.b16 %v172
    %v346 = vunpack.c.h.b16 %v172
    %v347 = vunpack.c.l.b16 %v173
    %v348 = vunpack.c.h.b16 %v173
    %v349 = vunpack.c.l.b16 %v174
    %v350 = vunpack.c.h.b16 %v174
    %v351 = vunpack.c.l.b16 %v175
    %v352 = vunpack.c.h.b16 %v175
    %v353 = vunpack.c.l.b16 %v176
    %v354 = vunpack.c.h.b16 %v176
    %v355 = vunpack.c.l.b16 %v177
    %v356 = vunpack.c.h.b16 %v177
    %v357 = vunpack.c.l.b16 %v178
    %v358 = vunpack.c.h.b16 %v178
    %v359 = vunpack.c.l.b16 %v179
    %v360 = vunpack.c.h.b16 %v179
    %v361 = vunpack.c.l.b16 %v180
    %v362 = vunpack.c.h.b16 %v180
    %v363 = vunpack.c.l.b16 %v181
    %v364 = vunpack.c.h.b16 %v181
    %v365 = vunpack.c.l.b16 %v182
    %v366 = vunpack.c.h.b16 %v182
    %v367 = vunpack.c.l.b16 %v183
    %v368 = vunpack.c.h.b16 %v183
    %v369 = vunpack.c.l.b16 %v184
    %v370 = vunpack.c.h.b16 %v184
    %v371 = vunpack.c.l.b16 %v185
    %v372 = vunpack.c.h.b16 %v185
    %v373 = vunpack.c.l.b16 %v186
    %v374 = vunpack.c.h.b16 %v186
    %v375 = vunpack.c.l.b16 %v187
    %v376 = vunpack.c.h.b16 %v187
    %v377 = vunpack.c.l.b16 %v188
    %v378 = vunpack.c.h.b16 %v188
    %v379 = vunpack.c.l.b16 %v189
    %v380 = vunpack.c.h.b16 %v189
    %v381 = vunpack.c.l.b16 %v190
    %v382 = vunpack.c.h.b16 %v190
    %v383 = vunpack.c.l.b16 %v191
    %v384 = vunpack.c.h.b16 %v191
    %v385 = vunpack.c.l.b16 %v192
    %v386 = vunpack.c.h.b16 %v192
    %v387 = vunpack.c.l.b16 %v193
    %v388 = vunpack.c.h.b16 %v193
    %v389 = vunpack.c.l.b16 %v194
    %v390 = vunpack.c.h.b16 %v194
    %v391 = vunpack.c.l.b16 %v195
    %v392 = vunpack.c.h.b16 %v195
    %v393 = vunpack.c.l.b16 %v196
    %v394 = vunpack.c.h.b16 %v196
    %v395 = vunpack.c.l.b16 %v197
    %v396 = vunpack.c.h.b16 %v197
    %v397 = vunpack.c.l.b16 %v198
    %v398 = vunpack.c.h.b16 %v198
    %v399 = vunpack.c.l.b16 %v199
    %v400 = vunpack.c.h.b16 %v199
    %v401 = vunpack.c.l.b16 %v200
    %v402 = vunpack.c.h.b16 %v200
    %v403 = vunpack.c.l.b16 %v201
    %v404 = vunpack.c.h.b16 %v201
    %v405 = vunpack.c.l.b16 %v202
    %v406 = vunpack.c.h.b16 %v202
    %v407 = vpack.c.b16 %v281, %v279
    %v408 = vpack.c.b16 %v282, %v280
    %v409 = vpack.c.b16 %v285, %v283
    %v410 = vpack.c.b16 %v286, %v284
    %v411 = vpack.c.b16 %v289, %v287
    %v412 = vpack.c.b16 %v290, %v288
    %v413 = vpack.c.b16 %v293, %v291
    %v414 = vpack.c.b16 %v294, %v292
    %v415 = vpack.c.b16 %v297, %v295
    %v416 = vpack.c.b16 %v298, %v296
    %v417 = vpack.c.b16 %v301, %v299
    %v418 = vpack.c.b16 %v302, %v300
    %v419 = vpack.c.b16 %v305, %v303
    %v420 = vpack.c.b16 %v306, %v304
    %v421 = vpack.c.b16 %v309, %v307
    %v422 = vpack.c.b16 %v310, %v308
    %v423 = vpack.c.b16 %v313, %v311
    %v424 = vpack.c.b16 %v314, %v312
    %v425 = vpack.c.b16 %v317, %v315
    %v426 = vpack.c.b16 %v318, %v316
    %v427 = vpack.c.b16 %v321, %v319
    %v428 = vpack.c.b16 %v322, %v320
    %v429 = vpack.c.b16 %v325, %v323
    %v430 = vpack.c.b16 %v326, %v324
    %v431 = vpack.c.b16 %v329, %v327
    %v432 = vpack.c.b16 %v330, %v328
    %v433 = vpack.c.b16 %v333, %v331
    %v434 = vpack.c.b16 %v334, %v332
    %v435 = vpack.c.b16 %v337, %v335
    %v436 = vpack.c.b16 %v338, %v336
    %v437 = vpack.c.b16 %v341, %v339
    %v438 = vpack.c.b16 %v342, %v340
    %v439 = vpack.c.b16 %v345, %v343
    %v440 = vpack.c.b16 %v346, %v344
    %v441 = vpack.c.b16 %v349, %v347
    %v442 = vpack.c.b16 %v350, %v348
    %v443 = vpack.c.b16 %v353, %v351
    %v444 = vpack.c.b16 %v354, %v352
    %v445 = vpack.c.b16 %v357, %v355
    %v446 = vpack.c.b16 %v358, %v356
    %v447 = vpack.c.b16 %v361, %v359
    %v448 = vpack.c.b16 %v362, %v360
    %v449 = vpack.c.b16 %v365, %v363
    %v450 = vpack.c.b16 %v366, %v364
    %v451 = vpack.c.b16 %v369, %v367
    %v452 = vpack.c.b16 %v370, %v368
    %v453 = vpack.c.b16 %v373, %v371
    %v454 = vpack.c.b16 %v374, %v372
    %v455 = vpack.c.b16 %v377, %v375
    %v456 = vpack.c.b16 %v378, %v376
    %v457 = vpack.c.b16 %v381, %v379
    %v458 = vpack.c.b16 %v382, %v380
    %v459 = vpack.c.b16 %v385, %v383
    %v460 = vpack.c.b16 %v386, %v384
    %v461 = vpack.c.b16 %v389, %v387
    %v462 = vpack.c.b16 %v390, %v388
    %v463 = vpack.c.b16 %v393, %v391
    %v464 = vpack.c.b16 %v394, %v392
    %v465 = vpack.c.b16 %v397, %v395
    %v466 = vpack.c.b16 %v398, %v396
    %v467 = vpack.c.b16 %v401, %v399
    %v468 = vpack.c.b16 %v402, %v400
    %v469 = vpack.c.b16 %v405, %v403
    %v470 = vpack.c.b16 %v406, %v404
    %535 = vmatprep.subr.bf16.mxu0 %v408
    %536 = vmatpush1.bf16.msra.mxu0 %v407
    %537 = vmatprep.subr.bf16.mxu0 %v410
    %538 = vmatpush1.bf16.msra.mxu0 %v409
    %539 = vmatprep.subr.bf16.mxu0 %v412
    %540 = vmatpush1.bf16.msra.mxu0 %v411
    %541 = vmatprep.subr.bf16.mxu0 %v414
    %542 = vmatpush1.bf16.msra.mxu0 %v413
    %543 = vmatprep.subr.bf16.mxu0 %v416
    %544 = vmatpush1.bf16.msra.mxu0 %v415
    %545 = vmatprep.subr.bf16.mxu0 %v418
    %546 = vmatpush1.bf16.msra.mxu0 %v417
    %547 = vmatprep.subr.bf16.mxu0 %v420
    %548 = vmatpush1.bf16.msra.mxu0 %v419
    %549 = vmatprep.subr.bf16.mxu0 %v422
    %550 = vmatpush1.bf16.msra.mxu0 %v421
    %551 = vmatprep.subr.bf16.mxu0 %v424
    %552 = vmatpush1.bf16.msra.mxu0 %v423
    %553 = vmatprep.subr.bf16.mxu0 %v426
    %554 = vmatpush1.bf16.msra.mxu0 %v425
    %555 = vmatprep.subr.bf16.mxu0 %v428
    %556 = vmatpush1.bf16.msra.mxu0 %v427
    %557 = vmatprep.subr.bf16.mxu0 %v430
    %558 = vmatpush1.bf16.msra.mxu0 %v429
    %559 = vmatprep.subr.bf16.mxu0 %v432
    %560 = vmatpush1.bf16.msra.mxu0 %v431
    %561 = vmatprep.subr.bf16.mxu0 %v434
    %562 = vmatpush1.bf16.msra.mxu0 %v433
    %563 = vmatprep.subr.bf16.mxu0 %v436
    %564 = vmatpush1.bf16.msra.mxu0 %v435
    %565 = vmatprep.subr.bf16.mxu0 %v438
    %566 = vmatpush1.bf16.msra.mxu0 %v437
    %567 = vmatprep.mubr.bf16.mxu0 %v136
    %568 = vmatmul.mubr.bf16.gmra.mrb[0].mxu0 %v135
    %v569 = vpop.f32.mrb[0].mxu0
    %v570 = vadd.f32 %v208, %v569
    %v571 = vpop.f32.mrb[0].mxu0
    %v572 = vadd.f32 %v212, %v571
    %v573 = vpop.f32.mrb[0].mxu0
    %v574 = vadd.f32 %v208, %v573
    %v575 = vpop.f32.mrb[0].mxu0
    %v576 = vadd.f32 %v212, %v575
    %577 = vdwg.mxu0
    %578 = vmatprep.subr.bf16.mxu0 %v440
    %579 = vmatpush1.bf16.msra.mxu0 %v439
    %580 = vmatprep.subr.bf16.mxu0 %v442
    %581 = vmatpush1.bf16.msra.mxu0 %v441
    %582 = vmatprep.subr.bf16.mxu0 %v444
    %583 = vmatpush1.bf16.msra.mxu0 %v443
    %584 = vmatprep.subr.bf16.mxu0 %v446
    %585 = vmatpush1.bf16.msra.mxu0 %v445
    %586 = vmatprep.subr.bf16.mxu0 %v448
    %587 = vmatpush1.bf16.msra.mxu0 %v447
    %588 = vmatprep.subr.bf16.mxu0 %v450
    %589 = vmatpush1.bf16.msra.mxu0 %v449
    %590 = vmatprep.subr.bf16.mxu0 %v452
    %591 = vmatpush1.bf16.msra.mxu0 %v451
    %592 = vmatprep.subr.bf16.mxu0 %v454
    %593 = vmatpush1.bf16.msra.mxu0 %v453
    %594 = vmatprep.subr.bf16.mxu0 %v456
    %595 = vmatpush1.bf16.msra.mxu0 %v455
    %596 = vmatprep.subr.bf16.mxu0 %v458
    %597 = vmatpush1.bf16.msra.mxu0 %v457
    %598 = vmatprep.subr.bf16.mxu0 %v460
    %599 = vmatpush1.bf16.msra.mxu0 %v459
    %600 = vmatprep.subr.bf16.mxu0 %v462
    %601 = vmatpush1.bf16.msra.mxu0 %v461
    %602 = vmatprep.subr.bf16.mxu0 %v464
    %603 = vmatpush1.bf16.msra.mxu0 %v463
    %604 = vmatprep.subr.bf16.mxu0 %v466
    %605 = vmatpush1.bf16.msra.mxu0 %v465
    %606 = vmatprep.subr.bf16.mxu0 %v468
    %607 = vmatpush1.bf16.msra.mxu0 %v467
    %608 = vmatprep.subr.bf16.mxu0 %v470
    %609 = vmatpush1.bf16.msra.mxu0 %v469
    %610 = vmatprep.mubr.bf16.mxu0 %v138
    %611 = vmatmul.mubr.bf16.gmra.mrb[0].mxu0 %v137
    %v612 = vpop.f32.mrb[0].mxu0
    %v613 = vadd.f32 %v570, %v612
    %v614 = vpop.f32.mrb[0].mxu0
    %v615 = vadd.f32 %v572, %v614
    %v616 = vpop.f32.mrb[0].mxu0
    %v617 = vadd.f32 %v574, %v616
    %v618 = vpop.f32.mrb[0].mxu0
    %v619 = vadd.f32 %v576, %v618
    %620 = vdwg.mxu0
    %v621 = vmax.f32 %v613, 0.0
    %v622 = vmax.f32 %v615, 0.0
    %v623 = vmax.f32 %v617, 0.0
    %v624 = vmax.f32 %v619, 0.0
    %v625 = vpack.c.bf16 %v623, %v621
    %v626 = vpack.c.bf16 %v624, %v622
    %v627 = vld [vmem:[#allocation6] sm:$0xff]
    %v628 = vld [vmem:[#allocation6 + $0x8] sm:$0xff]
    %v629 = vld [vmem:[#allocation6 + $0x10] sm:$0xff]
    %v630 = vld [vmem:[#allocation6 + $0x18] sm:$0xff]
    %v631 = vld [vmem:[#allocation6 + $0x20] sm:$0xff]
    %v632 = vld [vmem:[#allocation6 + $0x28] sm:$0xff]
    %v633 = vld [vmem:[#allocation6 + $0x30] sm:$0xff]
    %v634 = vld [vmem:[#allocation6 + $0x38] sm:$0xff]
    %v635 = vld [vmem:[#allocation6 + $0x40] sm:$0xff]
    %v636 = vld [vmem:[#allocation6 + $0x48] sm:$0xff]
    %v637 = vld [vmem:[#allocation6 + $0x50] sm:$0xff]
    %v638 = vld [vmem:[#allocation6 + $0x58] sm:$0xff]
    %v639 = vld [vmem:[#allocation6 + $0x60] sm:$0xff]
    %v640 = vld [vmem:[#allocation6 + $0x68] sm:$0xff]
    %v641 = vld [vmem:[#allocation6 + $0x70] sm:$0xff]
    %v642 = vld [vmem:[#allocation6 + $0x78] sm:$0xff]
    %v643 = vld [vmem:[#allocation6 + $0x80] sm:$0xff]
    %v644 = vld [vmem:[#allocation6 + $0x88] sm:$0xff]
    %v645 = vld [vmem:[#allocation6 + $0x90] sm:$0xff]
    %v646 = vld [vmem:[#allocation6 + $0x98] sm:$0xff]
    %v647 = vld [vmem:[#allocation6 + $0xa0] sm:$0xff]
    %v648 = vld [vmem:[#allocation6 + $0xa8] sm:$0xff]
    %v649 = vld [vmem:[#allocation6 + $0xb0] sm:$0xff]
    %v650 = vld [vmem:[#allocation6 + $0xb8] sm:$0xff]
    %v651 = vld [vmem:[#allocation6 + $0xc0] sm:$0xff]
    %v652 = vld [vmem:[#allocation6 + $0xc8] sm:$0xff]
    %v653 = vld [vmem:[#allocation6 + $0xd0] sm:$0xff]
    %v654 = vld [vmem:[#allocation6 + $0xd8] sm:$0xff]
    %v655 = vld [vmem:[#allocation6 + $0xe0] sm:$0xff]
    %v656 = vld [vmem:[#allocation6 + $0xe8] sm:$0xff]
    %v657 = vld [vmem:[#allocation6 + $0xf0] sm:$0xff]
    %v658 = vld [vmem:[#allocation6 + $0xf8] sm:$0xff]
    %v659 = vld [vmem:[#allocation7] sm:$0x3]
    %v661 = vlaneseq
    %v662 = vshrl.u32 %v661, 7
    %v663 = vsub.s32 0, %v662
    %v664 = vrot.slane %v659, %v663
    %v665 = vlaneseq
    %v666 = vshrl.u32 %v665, 7
    %v667 = vsub.s32 1, %v666
    %v668 = vrot.slane %v659, %v667
    %v703 = vunpack.c.l.b16 %v627
    %v704 = vunpack.c.h.b16 %v627
    %v705 = vunpack.c.l.b16 %v628
    %v706 = vunpack.c.h.b16 %v628
    %v707 = vunpack.c.l.b16 %v629
    %v708 = vunpack.c.h.b16 %v629
    %v709 = vunpack.c.l.b16 %v630
    %v710 = vunpack.c.h.b16 %v630
    %v711 = vunpack.c.l.b16 %v631
    %v712 = vunpack.c.h.b16 %v631
    %v713 = vunpack.c.l.b16 %v632
    %v714 = vunpack.c.h.b16 %v632
    %v715 = vunpack.c.l.b16 %v633
    %v716 = vunpack.c.h.b16 %v633
    %v717 = vunpack.c.l.b16 %v634
    %v718 = vunpack.c.h.b16 %v634
    %v719 = vunpack.c.l.b16 %v635
    %v720 = vunpack.c.h.b16 %v635
    %v721 = vunpack.c.l.b16 %v636
    %v722 = vunpack.c.h.b16 %v636
    %v723 = vunpack.c.l.b16 %v637
    %v724 = vunpack.c.h.b16 %v637
    %v725 = vunpack.c.l.b16 %v638
    %v726 = vunpack.c.h.b16 %v638
    %v727 = vunpack.c.l.b16 %v639
    %v728 = vunpack.c.h.b16 %v639
    %v729 = vunpack.c.l.b16 %v640
    %v730 = vunpack.c.h.b16 %v640
    %v731 = vunpack.c.l.b16 %v641
    %v732 = vunpack.c.h.b16 %v641
    %v733 = vunpack.c.l.b16 %v642
    %v734 = vunpack.c.h.b16 %v642
    %v735 = vunpack.c.l.b16 %v643
    %v736 = vunpack.c.h.b16 %v643
    %v737 = vunpack.c.l.b16 %v644
    %v738 = vunpack.c.h.b16 %v644
    %v739 = vunpack.c.l.b16 %v645
    %v740 = vunpack.c.h.b16 %v645
    %v741 = vunpack.c.l.b16 %v646
    %v742 = vunpack.c.h.b16 %v646
    %v743 = vunpack.c.l.b16 %v647
    %v744 = vunpack.c.h.b16 %v647
    %v745 = vunpack.c.l.b16 %v648
    %v746 = vunpack.c.h.b16 %v648
    %v747 = vunpack.c.l.b16 %v649
    %v748 = vunpack.c.h.b16 %v649
    %v749 = vunpack.c.l.b16 %v650
    %v750 = vunpack.c.h.b16 %v650
    %v751 = vunpack.c.l.b16 %v651
    %v752 = vunpack.c.h.b16 %v651
    %v753 = vunpack.c.l.b16 %v652
    %v754 = vunpack.c.h.b16 %v652
    %v755 = vunpack.c.l.b16 %v653
    %v756 = vunpack.c.h.b16 %v653
    %v757 = vunpack.c.l.b16 %v654
    %v758 = vunpack.c.h.b16 %v654
    %v759 = vunpack.c.l.b16 %v655
    %v760 = vunpack.c.h.b16 %v655
    %v761 = vunpack.c.l.b16 %v656
    %v762 = vunpack.c.h.b16 %v656
    %v763 = vunpack.c.l.b16 %v657
    %v764 = vunpack.c.h.b16 %v657
    %v765 = vunpack.c.l.b16 %v658
    %v766 = vunpack.c.h.b16 %v658
    %v767 = vpack.c.b16 %v705, %v703
    %v768 = vpack.c.b16 %v706, %v704
    %v769 = vpack.c.b16 %v709, %v707
    %v770 = vpack.c.b16 %v710, %v708
    %v771 = vpack.c.b16 %v713, %v711
    %v772 = vpack.c.b16 %v714, %v712
    %v773 = vpack.c.b16 %v717, %v715
    %v774 = vpack.c.b16 %v718, %v716
    %v775 = vpack.c.b16 %v721, %v719
    %v776 = vpack.c.b16 %v722, %v720
    %v777 = vpack.c.b16 %v725, %v723
    %v778 = vpack.c.b16 %v726, %v724
    %v779 = vpack.c.b16 %v729, %v727
    %v780 = vpack.c.b16 %v730, %v728
    %v781 = vpack.c.b16 %v733, %v731
    %v782 = vpack.c.b16 %v734, %v732
    %v783 = vpack.c.b16 %v737, %v735
    %v784 = vpack.c.b16 %v738, %v736
    %v785 = vpack.c.b16 %v741, %v739
    %v786 = vpack.c.b16 %v742, %v740
    %v787 = vpack.c.b16 %v745, %v743
    %v788 = vpack.c.b16 %v746, %v744
    %v789 = vpack.c.b16 %v749, %v747
    %v790 = vpack.c.b16 %v750, %v748
    %v791 = vpack.c.b16 %v753, %v751
    %v792 = vpack.c.b16 %v754, %v752
    %v793 = vpack.c.b16 %v757, %v755
    %v794 = vpack.c.b16 %v758, %v756
    %v795 = vpack.c.b16 %v761, %v759
    %v796 = vpack.c.b16 %v762, %v760
    %v797 = vpack.c.b16 %v765, %v763
    %v798 = vpack.c.b16 %v766, %v764
    %831 = vmatprep.subr.bf16.mxu0 %v768
    %832 = vmatpush1.bf16.msra.mxu0 %v767
    %833 = vmatprep.subr.bf16.mxu0 %v770
    %834 = vmatpush1.bf16.msra.mxu0 %v769
    %835 = vmatprep.subr.bf16.mxu0 %v772
    %836 = vmatpush1.bf16.msra.mxu0 %v771
    %837 = vmatprep.subr.bf16.mxu0 %v774
    %838 = vmatpush1.bf16.msra.mxu0 %v773
    %839 = vmatprep.subr.bf16.mxu0 %v776
    %840 = vmatpush1.bf16.msra.mxu0 %v775
    %841 = vmatprep.subr.bf16.mxu0 %v778
    %842 = vmatpush1.bf16.msra.mxu0 %v777
    %843 = vmatprep.subr.bf16.mxu0 %v780
    %844 = vmatpush1.bf16.msra.mxu0 %v779
    %845 = vmatprep.subr.bf16.mxu0 %v782
    %846 = vmatpush1.bf16.msra.mxu0 %v781
    %847 = vmatprep.subr.bf16.mxu0 %v784
    %848 = vmatpush1.bf16.msra.mxu0 %v783
    %849 = vmatprep.subr.bf16.mxu0 %v786
    %850 = vmatpush1.bf16.msra.mxu0 %v785
    %851 = vmatprep.subr.bf16.mxu0 %v788
    %852 = vmatpush1.bf16.msra.mxu0 %v787
    %853 = vmatprep.subr.bf16.mxu0 %v790
    %854 = vmatpush1.bf16.msra.mxu0 %v789
    %855 = vmatprep.subr.bf16.mxu0 %v792
    %856 = vmatpush1.bf16.msra.mxu0 %v791
    %857 = vmatprep.subr.bf16.mxu0 %v794
    %858 = vmatpush1.bf16.msra.mxu0 %v793
    %859 = vmatprep.subr.bf16.mxu0 %v796
    %860 = vmatpush1.bf16.msra.mxu0 %v795
    %861 = vmatprep.subr.bf16.mxu0 %v798
    %862 = vmatpush1.bf16.msra.mxu0 %v797
    %863 = vmatprep.mubr.bf16.mxu0 %v626
    %864 = vmatmul.mubr.bf16.gmra.mrb[0].mxu0 %v625
    %v865 = vpop.f32.mrb[0].mxu0
    %v866 = vadd.f32 %v664, %v865
    %v867 = vpop.f32.mrb[0].mxu0
    %v868 = vadd.f32 %v668, %v867
    %v869 = vpop.f32.mrb[0].mxu0
    %v870 = vadd.f32 %v664, %v869
    %v871 = vpop.f32.mrb[0].mxu0
    %v872 = vadd.f32 %v668, %v871
    %873 = vdwg.mxu0
    %v874 = vmax.f32 %v866, 0.0
    %v875 = vmax.f32 %v868, 0.0
    %v876 = vmax.f32 %v870, 0.0
    %v877 = vmax.f32 %v872, 0.0
    %v878 = vpack.c.bf16 %v876, %v874
    %v879 = vpack.c.bf16 %v877, %v875
    %v880 = vld [vmem:[#allocation9] sm:$0xf]
    %v881 = vld [vmem:[#allocation9 + $0x4] sm:$0xf]
    %v882 = vld [vmem:[#allocation9 + $0x8] sm:$0xf]
    %v883 = vld [vmem:[#allocation9 + $0xc] sm:$0xf]
    %v884 = vld [vmem:[#allocation9 + $0x10] sm:$0xf]
    %v885 = vld [vmem:[#allocation9 + $0x14] sm:$0xf]
    %v886 = vld [vmem:[#allocation9 + $0x18] sm:$0xf]
    %v887 = vld [vmem:[#allocation9 + $0x1c] sm:$0xf]
    %v888 = vld [vmem:[#allocation9 + $0x20] sm:$0xf]
    %v889 = vld [vmem:[#allocation9 + $0x24] sm:$0xf]
    %v890 = vld [vmem:[#allocation9 + $0x28] sm:$0xf]
    %v891 = vld [vmem:[#allocation9 + $0x2c] sm:$0xf]
    %v892 = vld [vmem:[#allocation9 + $0x30] sm:$0xf]
    %v893 = vld [vmem:[#allocation9 + $0x34] sm:$0xf]
    %v894 = vld [vmem:[#allocation9 + $0x38] sm:$0xf]
    %v895 = vld [vmem:[#allocation9 + $0x3c] sm:$0xf]
    %v896 = vld [vmem:[#allocation9 + $0x40] sm:$0xf]
    %v897 = vld [vmem:[#allocation9 + $0x44] sm:$0xf]
    %v898 = vld [vmem:[#allocation9 + $0x48] sm:$0xf]
    %v899 = vld [vmem:[#allocation9 + $0x4c] sm:$0xf]
    %v900 = vld [vmem:[#allocation9 + $0x50] sm:$0xf]
    %v901 = vld [vmem:[#allocation9 + $0x54] sm:$0xf]
    %v902 = vld [vmem:[#allocation9 + $0x58] sm:$0xf]
    %v903 = vld [vmem:[#allocation9 + $0x5c] sm:$0xf]
    %v904 = vld [vmem:[#allocation9 + $0x60] sm:$0xf]
    %v905 = vld [vmem:[#allocation9 + $0x64] sm:$0xf]
    %v906 = vld [vmem:[#allocation9 + $0x68] sm:$0xf]
    %v907 = vld [vmem:[#allocation9 + $0x6c] sm:$0xf]
    %v908 = vld [vmem:[#allocation9 + $0x70] sm:$0xf]
    %v909 = vld [vmem:[#allocation9 + $0x74] sm:$0xf]
    %v910 = vld [vmem:[#allocation9 + $0x78] sm:$0xf]
    %v911 = vld [vmem:[#allocation9 + $0x7c] sm:$0xf]
    %v912 = vld [vmem:[%s6] sm:$0x1]
    %v914 = vlaneseq
    %v915 = vshrl.u32 %v914, 7
    %v916 = vsub.s32 0, %v915
    %v917 = vrot.slane %v912, %v916
    %v951 = vunpack.c.l.b16 %v880
    %v952 = vunpack.c.l.b16 %v881
    %v953 = vunpack.c.l.b16 %v882
    %v954 = vunpack.c.l.b16 %v883
    %v955 = vunpack.c.l.b16 %v884
    %v956 = vunpack.c.l.b16 %v885
    %v957 = vunpack.c.l.b16 %v886
    %v958 = vunpack.c.l.b16 %v887
    %v959 = vunpack.c.l.b16 %v888
    %v960 = vunpack.c.l.b16 %v889
    %v961 = vunpack.c.l.b16 %v890
    %v962 = vunpack.c.l.b16 %v891
    %v963 = vunpack.c.l.b16 %v892
    %v964 = vunpack.c.l.b16 %v893
    %v965 = vunpack.c.l.b16 %v894
    %v966 = vunpack.c.l.b16 %v895
    %v967 = vunpack.c.l.b16 %v896
    %v968 = vunpack.c.l.b16 %v897
    %v969 = vunpack.c.l.b16 %v898
    %v970 = vunpack.c.l.b16 %v899
    %v971 = vunpack.c.l.b16 %v900
    %v972 = vunpack.c.l.b16 %v901
    %v973 = vunpack.c.l.b16 %v902
    %v974 = vunpack.c.l.b16 %v903
    %v975 = vunpack.c.l.b16 %v904
    %v976 = vunpack.c.l.b16 %v905
    %v977 = vunpack.c.l.b16 %v906
    %v978 = vunpack.c.l.b16 %v907
    %v979 = vunpack.c.l.b16 %v908
    %v980 = vunpack.c.l.b16 %v909
    %v981 = vunpack.c.l.b16 %v910
    %v982 = vunpack.c.l.b16 %v911
    %v983 = vpack.c.b16 %v952, %v951
    %v984 = vpack.c.b16 %v954, %v953
    %v985 = vpack.c.b16 %v956, %v955
    %v986 = vpack.c.b16 %v958, %v957
    %v987 = vpack.c.b16 %v960, %v959
    %v988 = vpack.c.b16 %v962, %v961
    %v989 = vpack.c.b16 %v964, %v963
    %v990 = vpack.c.b16 %v966, %v965
    %v991 = vpack.c.b16 %v968, %v967
    %v992 = vpack.c.b16 %v970, %v969
    %v993 = vpack.c.b16 %v972, %v971
    %v994 = vpack.c.b16 %v974, %v973
    %v995 = vpack.c.b16 %v976, %v975
    %v996 = vpack.c.b16 %v978, %v977
    %v997 = vpack.c.b16 %v980, %v979
    %v998 = vpack.c.b16 %v982, %v981
    %1015 = vmatprep.subr.bf16.mxu0 0
    %1016 = vmatpush1.bf16.msra.mxu0 %v983
    %1017 = vmatprep.subr.bf16.mxu0 0
    %1018 = vmatpush1.bf16.msra.mxu0 %v984
    %1019 = vmatprep.subr.bf16.mxu0 0
    %1020 = vmatpush1.bf16.msra.mxu0 %v985
    %1021 = vmatprep.subr.bf16.mxu0 0
    %1022 = vmatpush1.bf16.msra.mxu0 %v986
    %1023 = vmatprep.subr.bf16.mxu0 0
    %1024 = vmatpush1.bf16.msra.mxu0 %v987
    %1025 = vmatprep.subr.bf16.mxu0 0
    %1026 = vmatpush1.bf16.msra.mxu0 %v988
    %1027 = vmatprep.subr.bf16.mxu0 0
    %1028 = vmatpush1.bf16.msra.mxu0 %v989
    %1029 = vmatprep.subr.bf16.mxu0 0
    %1030 = vmatpush1.bf16.msra.mxu0 %v990
    %1031 = vmatprep.subr.bf16.mxu0 0
    %1032 = vmatpush1.bf16.msra.mxu0 %v991
    %1033 = vmatprep.subr.bf16.mxu0 0
    %1034 = vmatpush1.bf16.msra.mxu0 %v992
    %1035 = vmatprep.subr.bf16.mxu0 0
    %1036 = vmatpush1.bf16.msra.mxu0 %v993
    %1037 = vmatprep.subr.bf16.mxu0 0
    %1038 = vmatpush1.bf16.msra.mxu0 %v994
    %1039 = vmatprep.subr.bf16.mxu0 0
    %1040 = vmatpush1.bf16.msra.mxu0 %v995
    %1041 = vmatprep.subr.bf16.mxu0 0
    %1042 = vmatpush1.bf16.msra.mxu0 %v996
    %1043 = vmatprep.subr.bf16.mxu0 0
    %1044 = vmatpush1.bf16.msra.mxu0 %v997
    %1045 = vmatprep.subr.bf16.mxu0 0
    %1046 = vmatpush1.bf16.msra.mxu0 %v998
    %1047 = vmatprep.mubr.bf16.mxu0 %v879
    %1048 = vmatmul.mubr.bf16.gmra.mrb[0].mxu0 %v878
    %v1049 = vpop.f32.mrb[0].mxu0
    %v1050 = vadd.f32 %v917, %v1049
    %v1051 = vpop.f32.mrb[0].mxu0
    %v1052 = vpop.f32.mrb[0].mxu0
    %v1053 = vadd.f32 %v917, %v1052
    %v1054 = vpop.f32.mrb[0].mxu0
    %1055 = vdwg.mxu0
    %v1056 = vmax.f32 %v1050, 0.0
    %v1057 = vmax.f32 %v1053, 0.0
    %v1058 = vld [vmem:[%s7] sm:$0xf]
    %v1059 = vpack.c.bf16 %v1057, %v1056
    %vm1060 = vcmask 130048
    %v1062 = vsel %vm1060, %v1058, 0
    %1064 = vmatprep.subr.bf16.mxu0 0
    %1065 = vmatpush1.bf16.msra.mxu0 %v1059
    %1066 = vmatprep.subr.bf16.mxu0 0
    %1067 = vmatpush1.bf16.msra.mxu0 0
    %1068 = vmatprep.subr.bf16.mxu0 0
    %1069 = vmatpush1.bf16.msra.mxu0 0
    %1070 = vmatprep.subr.bf16.mxu0 0
    %1071 = vmatpush1.bf16.msra.mxu0 0
    %1072 = vmatprep.subr.bf16.mxu0 0
    %1073 = vmatpush1.bf16.msra.mxu0 0
    %1074 = vmatprep.subr.bf16.mxu0 0
    %1075 = vmatpush1.bf16.msra.mxu0 0
    %1076 = vmatprep.subr.bf16.mxu0 0
    %1077 = vmatpush1.bf16.msra.mxu0 0
    %1078 = vmatprep.subr.bf16.mxu0 0
    %1079 = vmatpush1.bf16.msra.mxu0 0
    %1080 = vmatprep.subr.bf16.mxu0 0
    %1081 = vmatpush1.bf16.msra.mxu0 0
    %1082 = vmatprep.subr.bf16.mxu0 0
    %1083 = vmatpush1.bf16.msra.mxu0 0
    %1084 = vmatprep.subr.bf16.mxu0 0
    %1085 = vmatpush1.bf16.msra.mxu0 0
    %1086 = vmatprep.subr.bf16.mxu0 0
    %1087 = vmatpush1.bf16.msra.mxu0 0
    %1088 = vmatprep.subr.bf16.mxu0 0
    %1089 = vmatpush1.bf16.msra.mxu0 0
    %1090 = vmatprep.subr.bf16.mxu0 0
    %1091 = vmatpush1.bf16.msra.mxu0 0
    %1092 = vmatprep.subr.bf16.mxu0 0
    %1093 = vmatpush1.bf16.msra.mxu0 0
    %1094 = vmatprep.subr.bf16.mxu0 0
    %1095 = vmatpush1.bf16.msra.mxu0 0
    %1096 = vmatprep.mubr.bf16.mxu0 0
    %1097 = vmatmul.mubr.bf16.gmra.mrb[0].mxu0 %v1062
    %v1098 = vpop.f32.mrb[0].mxu0
    %v1099 = vadd.f32 0.0, %v1098
    %v1100 = vpop.f32.mrb[0].mxu0
    %v1101 = vpop.f32.mrb[0].mxu0
    %v1102 = vpop.f32.mrb[0].mxu0
    %1103 = vdwg.mxu0
    %v1104 = vpack.c.bf16 %v1099, %v1099
    %v1105 = vld [vmem:[#allocation10] sm:$0xf]
    %v1106 = vld [vmem:[#allocation10 + $0x4] sm:$0xf]
    %v1107 = vld [vmem:[#allocation10 + $0x8] sm:$0xf]
    %v1108 = vld [vmem:[#allocation10 + $0xc] sm:$0xf]
    %v1109 = vld [vmem:[#allocation10 + $0x10] sm:$0xf]
    %v1110 = vld [vmem:[#allocation10 + $0x14] sm:$0xf]
    %v1111 = vld [vmem:[#allocation10 + $0x18] sm:$0xf]
    %v1112 = vld [vmem:[#allocation10 + $0x1c] sm:$0xf]
    %v1113 = vld [vmem:[#allocation10 + $0x20] sm:$0xf]
    %v1114 = vld [vmem:[#allocation10 + $0x24] sm:$0xf]
    %v1115 = vld [vmem:[#allocation10 + $0x28] sm:$0xf]
    %v1116 = vld [vmem:[#allocation10 + $0x2c] sm:$0xf]
    %v1117 = vld [vmem:[#allocation10 + $0x30] sm:$0xf]
    %v1118 = vld [vmem:[#allocation10 + $0x34] sm:$0xf]
    %v1119 = vld [vmem:[#allocation10 + $0x38] sm:$0xf]
    %v1120 = vld [vmem:[#allocation10 + $0x3c] sm:$0xf]
    %v1121 = vld [vmem:[#allocation12] sm:$0x1]
    %v1123 = vlaneseq
    %v1124 = vshrl.u32 %v1123, 7
    %v1125 = vsub.s32 0, %v1124
    %v1126 = vrot.slane %v1121, %v1125
    %v1144 = vunpack.c.l.b16 %v1105
    %v1145 = vunpack.c.l.b16 %v1106
    %v1146 = vunpack.c.l.b16 %v1107
    %v1147 = vunpack.c.l.b16 %v1108
    %v1148 = vunpack.c.l.b16 %v1109
    %v1149 = vunpack.c.l.b16 %v1110
    %v1150 = vunpack.c.l.b16 %v1111
    %v1151 = vunpack.c.l.b16 %v1112
    %v1152 = vunpack.c.l.b16 %v1113
    %v1153 = vunpack.c.l.b16 %v1114
    %v1154 = vunpack.c.l.b16 %v1115
    %v1155 = vunpack.c.l.b16 %v1116
    %v1156 = vunpack.c.l.b16 %v1117
    %v1157 = vunpack.c.l.b16 %v1118
    %v1158 = vunpack.c.l.b16 %v1119
    %v1159 = vunpack.c.l.b16 %v1120
    %v1160 = vpack.c.b16 %v1145, %v1144
    %v1161 = vpack.c.b16 %v1147, %v1146
    %v1162 = vpack.c.b16 %v1149, %v1148
    %v1163 = vpack.c.b16 %v1151, %v1150
    %v1164 = vpack.c.b16 %v1153, %v1152
    %v1165 = vpack.c.b16 %v1155, %v1154
    %v1166 = vpack.c.b16 %v1157, %v1156
    %v1167 = vpack.c.b16 %v1159, %v1158
    %1176 = vmatprep.subr.bf16.mxu0 0
    %1177 = vmatpush1.bf16.msra.mxu0 %v1160
    %1178 = vmatprep.subr.bf16.mxu0 0
    %1179 = vmatpush1.bf16.msra.mxu0 %v1161
    %1180 = vmatprep.subr.bf16.mxu0 0
    %1181 = vmatpush1.bf16.msra.mxu0 %v1162
    %1182 = vmatprep.subr.bf16.mxu0 0
    %1183 = vmatpush1.bf16.msra.mxu0 %v1163
    %1184 = vmatprep.subr.bf16.mxu0 0
    %1185 = vmatpush1.bf16.msra.mxu0 %v1164
    %1186 = vmatprep.subr.bf16.mxu0 0
    %1187 = vmatpush1.bf16.msra.mxu0 %v1165
    %1188 = vmatprep.subr.bf16.mxu0 0
    %1189 = vmatpush1.bf16.msra.mxu0 %v1166
    %1190 = vmatprep.subr.bf16.mxu0 0
    %1191 = vmatpush1.bf16.msra.mxu0 %v1167
    %1192 = vmatprep.subr.bf16.mxu0 0
    %1193 = vmatpush1.bf16.msra.mxu0 0
    %1194 = vmatprep.subr.bf16.mxu0 0
    %1195 = vmatpush1.bf16.msra.mxu0 0
    %1196 = vmatprep.subr.bf16.mxu0 0
    %1197 = vmatpush1.bf16.msra.mxu0 0
    %1198 = vmatprep.subr.bf16.mxu0 0
    %1199 = vmatpush1.bf16.msra.mxu0 0
    %1200 = vmatprep.subr.bf16.mxu0 0
    %1201 = vmatpush1.bf16.msra.mxu0 0
    %1202 = vmatprep.subr.bf16.mxu0 0
    %1203 = vmatpush1.bf16.msra.mxu0 0
    %1204 = vmatprep.subr.bf16.mxu0 0
    %1205 = vmatpush1.bf16.msra.mxu0 0
    %1206 = vmatprep.subr.bf16.mxu0 0
    %1207 = vmatpush1.bf16.msra.mxu0 0
    %1208 = vmatprep.mubr.bf16.mxu0 0
    %1209 = vmatmul.mubr.bf16.gmra.mrb[0].mxu0 %v1104
    %v1210 = vpop.f32.mrb[0].mxu0
    %v1211 = vadd.f32 %v1126, %v1210
    %v1212 = vpop.f32.mrb[0].mxu0
    %v1213 = vpop.f32.mrb[0].mxu0
    %v1214 = vpop.f32.mrb[0].mxu0
    %1215 = vdwg.mxu0
    %1216 = vst [vmem:[%s10] sm:$0xff] %v1211
    // Predicated region
    $region70: #{appnp_graph_classifier_forward.1} parent=1 // pred_check
      _
    $region71: #{appnp_graph_classifier_forward.1} parent=1 // pred_check_branch
      %1218 = sbr.rel (0) target = $region73
    $region72: #{appnp_graph_classifier_forward.1} parent=1 // pred_region
      _
    $region73: #{appnp_graph_classifier_forward.1} parent=1 // pred_fallthru
      _
    // Predicated region
    $region74: #{appnp_graph_classifier_forward.1} parent=1 // pred_check
      _
    $region75: #{appnp_graph_classifier_forward.1} parent=1 // pred_check_branch
      %1220 = sbr.rel (0) target = $region77
    $region76: #{appnp_graph_classifier_forward.1} parent=1 // pred_region
      _
    $region77: #{appnp_graph_classifier_forward.1} parent=1 // pred_fallthru
      _
    %1221 = vsyncpa [#allocation3], 1
    %1222 = vsyncpa [#allocation5], 1
    %1223 = vsyncpa [#allocation8], 1
    %1224 = vsyncpa [#allocation11], 1

</llo_original>
